<compile_context>
chip_gen: v7x
topology: tpu7x:2x2x1
jax: 0.10.0
libtpu: 0.0.40
codegen_flags: <defaults>
</compile_context>

<pallas_src>
import jax
import jax.numpy as jnp
from jax.experimental import pallas as pl
from jax.experimental.pallas import tpu as pltpu

_HIDDEN = 32


def _mlp_kernel(x_ref,
                w1_ref, b1_ref,
                w2_ref, b2_ref,
                w3_ref, b3_ref,
                w4_ref, b4_ref,
                o_ref):
    # x_ref: [F, Bt] f32 (batch on the 128-lane axis); activations are [H, Bt].
    # w1/b* are f32; w2/w3/w4 are bf16 (MXU operands), accumulation is f32.
    x = x_ref[...]
    F = x.shape[0]

    # --- layer 1: K = F is tiny -> the MXU would be <2% utilized and only add
    # push/pop latency to the dependent chain.  Unrolled f32 VPU outer-product
    # accumulation instead (F is a static trace-time constant).
    if F <= 8:
        w1 = w1_ref[...]                           # [H, F] f32
        h = w1[:, 0:1] * x[0:1, :] + b1_ref[...]   # [H, Bt] f32
        for f in range(1, F):
            h = h + w1[:, f:f + 1] * x[f:f + 1, :]
    else:
        h = jnp.dot(w1_ref[...].astype(jnp.bfloat16), x.astype(jnp.bfloat16),
                    preferred_element_type=jnp.float32) + b1_ref[...]
    h = jnp.maximum(h, 0.0)

    # --- layers 2 / 3: 32x32 bf16 MXU matmuls, f32 accumulate, f32 bias/ReLU.
    h = jnp.dot(w2_ref[...], h.astype(jnp.bfloat16),
                preferred_element_type=jnp.float32) + b2_ref[...]
    h = jnp.maximum(h, 0.0)
    h = jnp.dot(w3_ref[...], h.astype(jnp.bfloat16),
                preferred_element_type=jnp.float32) + b3_ref[...]
    h = jnp.maximum(h, 0.0)

    # --- output layer: [n_actions, H] @ [H, Bt] -> lane-dense [n_actions, Bt].
    y = jnp.dot(w4_ref[...], h.astype(jnp.bfloat16),
                preferred_element_type=jnp.float32) + b4_ref[...]
    o_ref[...] = y.astype(o_ref.dtype)


def rl_forward_fm(x_fm, params, *, block_b=16384):
    """Fast path: x_fm is feature-major [F, B] f32; returns [n_actions, B] f32.

    No transposes, no layout copies when B is a multiple of 128.
    """
    assert block_b % 128 == 0 and block_b >= 128
    F, B = x_fm.shape
    H = params["w1"].shape[0]
    n_actions = params["w4"].shape[0]

    # ---- choose the batch tiling ------------------------------------------
    # round the batch up to whole 128-lane columns, then split it into grid
    # steps: each step <= block_b lanes, at least 2 steps when B >= 256 so
    # v7x's two TensorCores both get work, and padding stays ~<=128 lanes/step.
    k = pl.cdiv(B, 128)                      # 128-lane columns needed
    n_steps = pl.cdiv(k * 128, block_b)      # cap per-step tile at block_b
    if k >= 2:
        n_steps = max(n_steps, 2)            # v7x: shard batch over 2 TCs
    n_steps = min(n_steps, k)                # each step >= 128 lanes
    bt = pl.cdiv(k, n_steps) * 128
    b_pad = n_steps * bt

    if b_pad != B:
        # Only the ragged tail (< n_steps*128 lanes) is padded; lane-aligned
        # batches go straight through with zero extra HBM traffic.
        x_fm = jnp.pad(x_fm, ((0, 0), (0, b_pad - B)))

    grid = (n_steps,)

    def resident(shape):
        # Same block every grid step -> stays in VMEM across the whole grid.
        return pl.BlockSpec(shape, lambda i: (0, 0))

    flops = 2 * b_pad * (F * H + H * H + H * H + H * n_actions)
    weight_bytes = (4 * (F * H + H)                 # w1/b1 f32
                    + 2 * (H * H) * 2 + 4 * (H * 2)  # w2,w3 bf16 + b2,b3 f32
                    + 2 * (H * n_actions) + 4 * n_actions)
    bytes_accessed = 4 * (F * b_pad + n_actions * b_pad) + weight_bytes

    out_fm = pl.pallas_call(
        _mlp_kernel,
        out_shape=jax.ShapeDtypeStruct((n_actions, b_pad), jnp.float32),
        grid=grid,
        in_specs=[
            pl.BlockSpec((F, bt), lambda i: (0, i)),           # x tile, pipelined
            resident((H, F)), resident((H, 1)),                # layer 1 (f32)
            resident((H, H)), resident((H, 1)),                # layer 2 (w bf16)
            resident((H, H)), resident((H, 1)),                # layer 3 (w bf16)
            resident((n_actions, H)), resident((n_actions, 1)),  # layer 4 (w bf16)
        ],
        out_specs=pl.BlockSpec((n_actions, bt), lambda i: (0, i)),
        compiler_params=pltpu.CompilerParams(
            dimension_semantics=("parallel",)),                # v7x: 2-TC split
        cost_estimate=pl.CostEstimate(
            flops=flops, bytes_accessed=bytes_accessed, transcendentals=0),
    )(
        x_fm,
        params["w1"], params["b1"],
        params["w2"], params["b2"],
        params["w3"], params["b3"],
        params["w4"], params["b4"],
    )

    if b_pad != B:
        out_fm = out_fm[:, :B]
    return out_fm


def rl_forward(x, params, *, block_b=16384):
    """PyTorch-layout compat wrapper: x [B, F] -> [B, n_actions].

    Adds two small XLA transposes around the kernel; performance-critical
    callers should keep activations feature-major and use `rl_forward_fm`.
    """
    return rl_forward_fm(x.T, params, block_b=block_b).T


def init_params(key, input_dim, n_actions, hidden=_HIDDEN):
    """PyTorch-Linear-style init (uniform +-1/sqrt(fan_in)), kernel-ready layout.

    Weights are [out_features, in_features]; biases are [out_features, 1]
    columns (batch lives on the lane axis).  The MXU-fed weights (layers 2-4)
    are stored bf16; layer-1 weight and all biases stay f32.
    """
    dims = [(input_dim, hidden), (hidden, hidden), (hidden, hidden), (hidden, n_actions)]
    mxu_bf16 = {2, 3, 4}
    params = {}
    for i, (fan_in, fan_out) in enumerate(dims, start=1):
        key, kw, kb = jax.random.split(key, 3)
        bound = 1.0 / jnp.sqrt(jnp.float32(fan_in))
        w = jax.random.uniform(kw, (fan_out, fan_in), jnp.float32,
                               minval=-bound, maxval=bound)
        params[f"w{i}"] = w.astype(jnp.bfloat16) if i in mxu_bf16 else w
        params[f"b{i}"] = jax.random.uniform(kb, (fan_out, 1), jnp.float32,
                                             minval=-bound, maxval=bound)
    return params


def _reference_forward(x, params):
    """Pure-JAX f32 reference in the PyTorch layout: x [B, F] -> [B, n_actions]."""
    w2 = params["w2"].astype(jnp.float32)
    w3 = params["w3"].astype(jnp.float32)
    w4 = params["w4"].astype(jnp.float32)
    h = jnp.maximum(x @ params["w1"].T + params["b1"].T, 0.0)
    h = jnp.maximum(h @ w2.T + params["b2"].T, 0.0)
    h = jnp.maximum(h @ w3.T + params["b3"].T, 0.0)
    return h @ w4.T + params["b4"].T


if __name__ == "__main__":
    key = jax.random.PRNGKey(0)

    batch = 8          # batch size
    input_dim = 4      # input_shape[0] in the PyTorch module
    n_actions = 4

    key, kx, kp = jax.random.split(key, 3)
    x = jax.random.normal(kx, (batch, input_dim), dtype=jnp.float32)   # PyTorch layout
    params = init_params(kp, input_dim, n_actions)

    ref = _reference_forward(x, params)                                # [B, n_actions] f32

    # Fast path: feature-major in, action-major out (no transposes around the kernel).
    out_fm = rl_forward_fm(x.T, params)
    out_fm = jax.block_until_ready(out_fm)
    assert out_fm.shape == (n_actions, batch)
    assert jnp.allclose(out_fm.T, ref, atol=2e-2, rtol=2e-2), "fm path mismatch vs reference"

    # Drop-in PyTorch-layout wrapper.
    out = rl_forward(x, params)
    out = jax.block_until_ready(out)
    assert out.shape == (batch, n_actions)
    assert jnp.allclose(out, ref, atol=2e-2, rtol=2e-2), "compat path mismatch vs reference"

    print("KERNEL_OK")
</pallas_src>

<mosaic_0001>
module attributes {stable_mosaic.version = 11 : i64} {
  func.func @_mlp_kernel(%arg0: i32, %arg1: memref<4x128xf32, #tpu.memory_space<vmem>>, %arg2: memref<32x4xf32, #tpu.memory_space<vmem>>, %arg3: memref<32x1xf32, #tpu.memory_space<vmem>>, %arg4: memref<32x32xbf16, #tpu.memory_space<vmem>>, %arg5: memref<32x1xf32, #tpu.memory_space<vmem>>, %arg6: memref<32x32xbf16, #tpu.memory_space<vmem>>, %arg7: memref<32x1xf32, #tpu.memory_space<vmem>>, %arg8: memref<4x32xbf16, #tpu.memory_space<vmem>>, %arg9: memref<4x1xf32, #tpu.memory_space<vmem>>, %arg10: memref<4x128xf32, #tpu.memory_space<vmem>>) attributes {dimension_semantics = [#tpu.dimension_semantics<parallel>], iteration_bounds = array<i64: 1>, scalar_prefetch = 0 : i64, scratch_operands = 0 : i64, tpu.core_type = #tpu.core_type<tc>, window_params = [{transform_indices = @transform_0, window_bounds = array<i64: 4, 128>}, {pipeline_mode = #tpu.pipeline_mode<synchronous>, transform_indices = @transform_1, window_bounds = array<i64: 32, 4>}, {pipeline_mode = #tpu.pipeline_mode<synchronous>, transform_indices = @transform_2, window_bounds = array<i64: 32, 1>}, {pipeline_mode = #tpu.pipeline_mode<synchronous>, transform_indices = @transform_3, window_bounds = array<i64: 32, 32>}, {pipeline_mode = #tpu.pipeline_mode<synchronous>, transform_indices = @transform_4, window_bounds = array<i64: 32, 1>}, {pipeline_mode = #tpu.pipeline_mode<synchronous>, transform_indices = @transform_5, window_bounds = array<i64: 32, 32>}, {pipeline_mode = #tpu.pipeline_mode<synchronous>, transform_indices = @transform_6, window_bounds = array<i64: 32, 1>}, {pipeline_mode = #tpu.pipeline_mode<synchronous>, transform_indices = @transform_7, window_bounds = array<i64: 4, 32>}, {pipeline_mode = #tpu.pipeline_mode<synchronous>, transform_indices = @transform_8, window_bounds = array<i64: 4, 1>}, {transform_indices = @transform_9, window_bounds = array<i64: 4, 128>}]} {
    %c0 = arith.constant 0 : index
    %c0_0 = arith.constant 0 : index
    %0 = vector.load %arg1[%c0, %c0_0] : memref<4x128xf32, #tpu.memory_space<vmem>>, vector<4x128xf32>
    %c0_1 = arith.constant 0 : index
    %c0_2 = arith.constant 0 : index
    %1 = vector.load %arg2[%c0_1, %c0_2] : memref<32x4xf32, #tpu.memory_space<vmem>>, vector<32x4xf32>
    %2 = vector.extract_strided_slice %1 {offsets = [0, 0], sizes = [32, 1], strides = [1, 1]} : vector<32x4xf32> to vector<32x1xf32>
    %3 = vector.extract_strided_slice %0 {offsets = [0, 0], sizes = [1, 128], strides = [1, 1]} : vector<4x128xf32> to vector<1x128xf32>
    %4 = vector.broadcast %2 : vector<32x1xf32> to vector<32x128xf32>
    %5 = vector.broadcast %3 : vector<1x128xf32> to vector<32x128xf32>
    %6 = arith.mulf %4, %5 : vector<32x128xf32>
    %c0_3 = arith.constant 0 : index
    %c0_4 = arith.constant 0 : index
    %7 = vector.load %arg3[%c0_3, %c0_4] : memref<32x1xf32, #tpu.memory_space<vmem>>, vector<32x1xf32>
    %8 = vector.broadcast %7 : vector<32x1xf32> to vector<32x128xf32>
    %9 = arith.addf %6, %8 : vector<32x128xf32>
    %10 = vector.extract_strided_slice %1 {offsets = [0, 1], sizes = [32, 1], strides = [1, 1]} : vector<32x4xf32> to vector<32x1xf32>
    %11 = vector.extract_strided_slice %0 {offsets = [1, 0], sizes = [1, 128], strides = [1, 1]} : vector<4x128xf32> to vector<1x128xf32>
    %12 = vector.broadcast %10 : vector<32x1xf32> to vector<32x128xf32>
    %13 = vector.broadcast %11 : vector<1x128xf32> to vector<32x128xf32>
    %14 = arith.mulf %12, %13 : vector<32x128xf32>
    %15 = arith.addf %9, %14 : vector<32x128xf32>
    %16 = vector.extract_strided_slice %1 {offsets = [0, 2], sizes = [32, 1], strides = [1, 1]} : vector<32x4xf32> to vector<32x1xf32>
    %17 = vector.extract_strided_slice %0 {offsets = [2, 0], sizes = [1, 128], strides = [1, 1]} : vector<4x128xf32> to vector<1x128xf32>
    %18 = vector.broadcast %16 : vector<32x1xf32> to vector<32x128xf32>
    %19 = vector.broadcast %17 : vector<1x128xf32> to vector<32x128xf32>
    %20 = arith.mulf %18, %19 : vector<32x128xf32>
    %21 = arith.addf %15, %20 : vector<32x128xf32>
    %22 = vector.extract_strided_slice %1 {offsets = [0, 3], sizes = [32, 1], strides = [1, 1]} : vector<32x4xf32> to vector<32x1xf32>
    %23 = vector.extract_strided_slice %0 {offsets = [3, 0], sizes = [1, 128], strides = [1, 1]} : vector<4x128xf32> to vector<1x128xf32>
    %24 = vector.broadcast %22 : vector<32x1xf32> to vector<32x128xf32>
    %25 = vector.broadcast %23 : vector<1x128xf32> to vector<32x128xf32>
    %26 = arith.mulf %24, %25 : vector<32x128xf32>
    %27 = arith.addf %21, %26 : vector<32x128xf32>
    %cst = arith.constant 0.000000e+00 : f32
    %28 = vector.broadcast %cst : f32 to vector<32x128xf32>
    %29 = arith.maximumf %27, %28 : vector<32x128xf32>
    %c0_5 = arith.constant 0 : index
    %c0_6 = arith.constant 0 : index
    %30 = vector.load %arg4[%c0_5, %c0_6] : memref<32x32xbf16, #tpu.memory_space<vmem>>, vector<32x32xbf16>
    %31 = arith.truncf %29 : vector<32x128xf32> to vector<32x128xbf16>
    %cst_7 = arith.constant dense<0.000000e+00> : vector<32x128xf32>
    %32 = tpu.matmul %30, %31, %cst_7 {dimension_numbers = #tpu.dot_dimension_numbers<[1], [0], [0], [1], [0, 0, 1, 1], [], []>} : vector<32x32xbf16>, vector<32x128xbf16>, vector<32x128xf32> -> vector<32x128xf32>
    %c0_8 = arith.constant 0 : index
    %c0_9 = arith.constant 0 : index
    %33 = vector.load %arg5[%c0_8, %c0_9] : memref<32x1xf32, #tpu.memory_space<vmem>>, vector<32x1xf32>
    %34 = vector.broadcast %33 : vector<32x1xf32> to vector<32x128xf32>
    %35 = arith.addf %32, %34 : vector<32x128xf32>
    %cst_10 = arith.constant 0.000000e+00 : f32
    %36 = vector.broadcast %cst_10 : f32 to vector<32x128xf32>
    %37 = arith.maximumf %35, %36 : vector<32x128xf32>
    %c0_11 = arith.constant 0 : index
    %c0_12 = arith.constant 0 : index
    %38 = vector.load %arg6[%c0_11, %c0_12] : memref<32x32xbf16, #tpu.memory_space<vmem>>, vector<32x32xbf16>
    %39 = arith.truncf %37 : vector<32x128xf32> to vector<32x128xbf16>
    %cst_13 = arith.constant dense<0.000000e+00> : vector<32x128xf32>
    %40 = tpu.matmul %38, %39, %cst_13 {dimension_numbers = #tpu.dot_dimension_numbers<[1], [0], [0], [1], [0, 0, 1, 1], [], []>} : vector<32x32xbf16>, vector<32x128xbf16>, vector<32x128xf32> -> vector<32x128xf32>
    %c0_14 = arith.constant 0 : index
    %c0_15 = arith.constant 0 : index
    %41 = vector.load %arg7[%c0_14, %c0_15] : memref<32x1xf32, #tpu.memory_space<vmem>>, vector<32x1xf32>
    %42 = vector.broadcast %41 : vector<32x1xf32> to vector<32x128xf32>
    %43 = arith.addf %40, %42 : vector<32x128xf32>
    %cst_16 = arith.constant 0.000000e+00 : f32
    %44 = vector.broadcast %cst_16 : f32 to vector<32x128xf32>
    %45 = arith.maximumf %43, %44 : vector<32x128xf32>
    %c0_17 = arith.constant 0 : index
    %c0_18 = arith.constant 0 : index
    %46 = vector.load %arg8[%c0_17, %c0_18] : memref<4x32xbf16, #tpu.memory_space<vmem>>, vector<4x32xbf16>
    %47 = arith.truncf %45 : vector<32x128xf32> to vector<32x128xbf16>
    %cst_19 = arith.constant dense<0.000000e+00> : vector<4x128xf32>
    %48 = tpu.matmul %46, %47, %cst_19 {dimension_numbers = #tpu.dot_dimension_numbers<[1], [0], [0], [1], [0, 0, 1, 1], [], []>} : vector<4x32xbf16>, vector<32x128xbf16>, vector<4x128xf32> -> vector<4x128xf32>
    %c0_20 = arith.constant 0 : index
    %c0_21 = arith.constant 0 : index
    %49 = vector.load %arg9[%c0_20, %c0_21] : memref<4x1xf32, #tpu.memory_space<vmem>>, vector<4x1xf32>
    %50 = vector.broadcast %49 : vector<4x1xf32> to vector<4x128xf32>
    %51 = arith.addf %48, %50 : vector<4x128xf32>
    %c0_22 = arith.constant 0 : index
    %c0_23 = arith.constant 0 : index
    %52 = vector.load %arg10[%c0_22, %c0_23] : memref<4x128xf32, #tpu.memory_space<vmem>>, vector<4x128xf32>
    tpu.vector_store %arg10[%c0_22, %c0_23], %51 {strides = array<i32>} : memref<4x128xf32, #tpu.memory_space<vmem>>, vector<4x128xf32>,
    return
  }
  func.func @transform_0(%arg0: i32) -> (i32, i32) {
    %c0_i32 = arith.constant 0 : i32
    %c0_i32_0 = arith.constant 0 : i32
    return %c0_i32, %arg0 : i32, i32
  }
  func.func @transform_1(%arg0: i32) -> (i32, i32) {
    %c0_i32 = arith.constant 0 : i32
    %c0_i32_0 = arith.constant 0 : i32
    %c0_i32_1 = arith.constant 0 : i32
    return %c0_i32, %c0_i32_0 : i32, i32
  }
  func.func @transform_2(%arg0: i32) -> (i32, i32) {
    %c0_i32 = arith.constant 0 : i32
    %c0_i32_0 = arith.constant 0 : i32
    %c0_i32_1 = arith.constant 0 : i32
    return %c0_i32, %c0_i32_0 : i32, i32
  }
  func.func @transform_3(%arg0: i32) -> (i32, i32) {
    %c0_i32 = arith.constant 0 : i32
    %c0_i32_0 = arith.constant 0 : i32
    %c0_i32_1 = arith.constant 0 : i32
    return %c0_i32, %c0_i32_0 : i32, i32
  }
  func.func @transform_4(%arg0: i32) -> (i32, i32) {
    %c0_i32 = arith.constant 0 : i32
    %c0_i32_0 = arith.constant 0 : i32
    %c0_i32_1 = arith.constant 0 : i32
    return %c0_i32, %c0_i32_0 : i32, i32
  }
  func.func @transform_5(%arg0: i32) -> (i32, i32) {
    %c0_i32 = arith.constant 0 : i32
    %c0_i32_0 = arith.constant 0 : i32
    %c0_i32_1 = arith.constant 0 : i32
    return %c0_i32, %c0_i32_0 : i32, i32
  }
  func.func @transform_6(%arg0: i32) -> (i32, i32) {
    %c0_i32 = arith.constant 0 : i32
    %c0_i32_0 = arith.constant 0 : i32
    %c0_i32_1 = arith.constant 0 : i32
    return %c0_i32, %c0_i32_0 : i32, i32
  }
  func.func @transform_7(%arg0: i32) -> (i32, i32) {
    %c0_i32 = arith.constant 0 : i32
    %c0_i32_0 = arith.constant 0 : i32
    %c0_i32_1 = arith.constant 0 : i32
    return %c0_i32, %c0_i32_0 : i32, i32
  }
  func.func @transform_8(%arg0: i32) -> (i32, i32) {
    %c0_i32 = arith.constant 0 : i32
    %c0_i32_0 = arith.constant 0 : i32
    %c0_i32_1 = arith.constant 0 : i32
    return %c0_i32, %c0_i32_0 : i32, i32
  }
  func.func @transform_9(%arg0: i32) -> (i32, i32) {
    %c0_i32 = arith.constant 0 : i32
    %c0_i32_0 = arith.constant 0 : i32
    return %c0_i32, %arg0 : i32, i32
  }
}

</mosaic_0001>

<llo_original>
// kernel: tpu_custom_call.1
$region0: #{tpu_custom_call.1}
  #allocation0 [shape = 'u32[]', space=smem, size = 0x4, offset = 0x4, fixed_abs, tag = 'smem constant byte address 0x4 - core index']
  #allocation1 [shape = 'u32[144,128]{1,0:T(1,128)}', space=vmem, size = 0x12000, scoped, tag = 'internal scratch']
  %s0 = inlined_call_operand.vmem [shape: f32[4,128], index: 0, kind: input, shape index: {}]
  %s1 = inlined_call_operand.vmem [shape: f32[32,4], index: 1, kind: input, shape index: {}]
  %s2 = inlined_call_operand.vmem [shape: f32[32,1], index: 2, kind: input, shape index: {}]
  %s3 = inlined_call_operand.vmem [shape: bf16[32,32], index: 3, kind: input, shape index: {}]
  %s4 = inlined_call_operand.vmem [shape: f32[32,1], index: 4, kind: input, shape index: {}]
  %s5 = inlined_call_operand.vmem [shape: bf16[32,32], index: 5, kind: input, shape index: {}]
  %s6 = inlined_call_operand.vmem [shape: f32[32,1], index: 6, kind: input, shape index: {}]
  %s7 = inlined_call_operand.vmem [shape: bf16[4,32], index: 7, kind: input, shape index: {}]
  %s8 = inlined_call_operand.vmem [shape: f32[4,1], index: 8, kind: input, shape index: {}]
  %s9 = inlined_call_operand.hbm [shape: f32[4,128], index: 9, kind: output, shape index: {}]
  %s10 = sld [smem:[#allocation0]]
  $region46: #{tpu_custom_call.1} parent=0
    _
  %s12 = ssub.s32 1, %s10
  %s13 = scalar_select 0, %s12, %s10
  $region1: #{tpu_custom_call.1} parent=0
    #allocation2 [shape = 'u8[2048]{0}', space=vmem, size = 0x800, scoped, tag = 'output window, operand 0, single buffered']
    #allocation3 [shape = 's32[1]{0}', space=sflag, size = 0x4, scoped, tag = 'scoped memory for tpu_custom_call.1']
    %14 = vsyncpa [#allocation3], 0
    // Predicated region
    $region2: #{tpu_custom_call.1} parent=1 // pred_check
      _
    $region3: #{tpu_custom_call.1} parent=1 // pred_check_branch
      %16 = sbr.rel (0) target = $region5
    $region4: #{tpu_custom_call.1} parent=1 // pred_region
      _
    $region5: #{tpu_custom_call.1} parent=1 // pred_fallthru
      _
    // Predicated region
    $region6: #{tpu_custom_call.1} parent=1 // pred_check
      _
    $region7: #{tpu_custom_call.1} parent=1 // pred_check_branch
      %18 = sbr.rel (0) target = $region9
    $region8: #{tpu_custom_call.1} parent=1 // pred_region
      _
    $region9: #{tpu_custom_call.1} parent=1 // pred_fallthru
      _
    // Predicated region
    $region10: #{tpu_custom_call.1} parent=1 // pred_check
      _
    $region11: #{tpu_custom_call.1} parent=1 // pred_check_branch
      %20 = sbr.rel (0) target = $region13
    $region12: #{tpu_custom_call.1} parent=1 // pred_region
      _
    $region13: #{tpu_custom_call.1} parent=1 // pred_fallthru
      _
    // Predicated region
    $region14: #{tpu_custom_call.1} parent=1 // pred_check
      _
    $region15: #{tpu_custom_call.1} parent=1 // pred_check_branch
      %22 = sbr.rel (0) target = $region17
    $region16: #{tpu_custom_call.1} parent=1 // pred_region
      _
    $region17: #{tpu_custom_call.1} parent=1 // pred_fallthru
      _
    // Predicated region
    $region18: #{tpu_custom_call.1} parent=1 // pred_check
      _
    $region19: #{tpu_custom_call.1} parent=1 // pred_check_branch
      %24 = sbr.rel (0) target = $region21
    $region20: #{tpu_custom_call.1} parent=1 // pred_region
      _
    $region21: #{tpu_custom_call.1} parent=1 // pred_fallthru
      _
    // Predicated region
    $region22: #{tpu_custom_call.1} parent=1 // pred_check
      _
    $region23: #{tpu_custom_call.1} parent=1 // pred_check_branch
      %26 = sbr.rel (0) target = $region25
    $region24: #{tpu_custom_call.1} parent=1 // pred_region
      _
    $region25: #{tpu_custom_call.1} parent=1 // pred_fallthru
      _
    // Predicated region
    $region26: #{tpu_custom_call.1} parent=1 // pred_check
      _
    $region27: #{tpu_custom_call.1} parent=1 // pred_check_branch
      %28 = sbr.rel (0) target = $region29
    $region28: #{tpu_custom_call.1} parent=1 // pred_region
      _
    $region29: #{tpu_custom_call.1} parent=1 // pred_fallthru
      _
    // Predicated region
    $region30: #{tpu_custom_call.1} parent=1 // pred_check
      _
    $region31: #{tpu_custom_call.1} parent=1 // pred_check_branch
      %30 = sbr.rel (0) target = $region33
    $region32: #{tpu_custom_call.1} parent=1 // pred_region
      _
    $region33: #{tpu_custom_call.1} parent=1 // pred_fallthru
      _
    // Predicated region
    $region34: #{tpu_custom_call.1} parent=1 // pred_check
      _
    $region35: #{tpu_custom_call.1} parent=1 // pred_check_branch
      %32 = sbr.rel (0) target = $region37
    $region36: #{tpu_custom_call.1} parent=1 // pred_region
      _
    $region37: #{tpu_custom_call.1} parent=1 // pred_fallthru
      _
    %v34 = vld [vmem:[%s0] sm:$0xf]
    %v35 = vld [vmem:[%s1] sm:$0xff]
    %v36 = vld [vmem:[%s1 + $0x8] sm:$0xff]
    %v37 = vld [vmem:[%s1 + $0x10] sm:$0xff]
    %v38 = vld [vmem:[%s1 + $0x18] sm:$0xff]
    %40 = vset.pattern.permute.xlu0 0
    %41 = vperm.xlu0 %40, %v35
    %v42 = vpop.permute.xlu0 %41
    %45 = vset.pattern.permute.xlu0 0
    %46 = vperm.xlu0 %45, %v36
    %v47 = vpop.permute.xlu0 %46
    %50 = vset.pattern.permute.xlu0 0
    %51 = vperm.xlu0 %50, %v37
    %v52 = vpop.permute.xlu0 %51
    %55 = vset.pattern.permute.xlu0 0
    %56 = vperm.xlu0 %55, %v38
    %v57 = vpop.permute.xlu0 %56
    %v59 = vlaneseq
    %v60 = vshrl.u32 %v59, 7
    %v61 = vsub.s32 0, %v60
    %v62 = vrot.slane %v34, %v61
    %v63 = vmul.f32 %v42, %v62
    %v64 = vmul.f32 %v47, %v62
    %v65 = vmul.f32 %v52, %v62
    %v66 = vmul.f32 %v57, %v62
    %v67 = vld [vmem:[%s2] sm:$0xff]
    %v68 = vld [vmem:[%s2 + $0x8] sm:$0xff]
    %v69 = vld [vmem:[%s2 + $0x10] sm:$0xff]
    %v70 = vld [vmem:[%s2 + $0x18] sm:$0xff]
    %72 = vset.pattern.permute.xlu0 0
    %73 = vperm.xlu0 %72, %v67
    %v74 = vpop.permute.xlu0 %73
    %77 = vset.pattern.permute.xlu0 0
    %78 = vperm.xlu0 %77, %v68
    %v79 = vpop.permute.xlu0 %78
    %82 = vset.pattern.permute.xlu0 0
    %83 = vperm.xlu0 %82, %v69
    %v84 = vpop.permute.xlu0 %83
    %87 = vset.pattern.permute.xlu0 0
    %88 = vperm.xlu0 %87, %v70
    %v89 = vpop.permute.xlu0 %88
    %v91 = vadd.f32 %v63, %v74
    %v92 = vadd.f32 %v64, %v79
    %v93 = vadd.f32 %v65, %v84
    %v94 = vadd.f32 %v66, %v89
    %95 = vset.pattern.permute.xlu0 1
    %96 = vperm.xlu0 %95, %v35
    %v97 = vpop.permute.xlu0 %96
    %99 = vset.pattern.permute.xlu0 1
    %100 = vperm.xlu0 %99, %v36
    %v101 = vpop.permute.xlu0 %100
    %103 = vset.pattern.permute.xlu0 1
    %104 = vperm.xlu0 %103, %v37
    %v105 = vpop.permute.xlu0 %104
    %107 = vset.pattern.permute.xlu0 1
    %108 = vperm.xlu0 %107, %v38
    %v109 = vpop.permute.xlu0 %108
    %v111 = vlaneseq
    %v112 = vshrl.u32 %v111, 7
    %v113 = vsub.s32 1, %v112
    %v114 = vrot.slane %v34, %v113
    %v115 = vmul.f32 %v97, %v114
    %v116 = vmul.f32 %v101, %v114
    %v117 = vmul.f32 %v105, %v114
    %v118 = vmul.f32 %v109, %v114
    %v119 = vadd.f32 %v91, %v115
    %v120 = vadd.f32 %v92, %v116
    %v121 = vadd.f32 %v93, %v117
    %v122 = vadd.f32 %v94, %v118
    %123 = vset.pattern.permute.xlu0 2
    %124 = vperm.xlu0 %123, %v35
    %v125 = vpop.permute.xlu0 %124
    %127 = vset.pattern.permute.xlu0 2
    %128 = vperm.xlu0 %127, %v36
    %v129 = vpop.permute.xlu0 %128
    %131 = vset.pattern.permute.xlu0 2
    %132 = vperm.xlu0 %131, %v37
    %v133 = vpop.permute.xlu0 %132
    %135 = vset.pattern.permute.xlu0 2
    %136 = vperm.xlu0 %135, %v38
    %v137 = vpop.permute.xlu0 %136
    %v139 = vlaneseq
    %v140 = vshrl.u32 %v139, 7
    %v141 = vsub.s32 2, %v140
    %v142 = vrot.slane %v34, %v141
    %v143 = vmul.f32 %v125, %v142
    %v144 = vmul.f32 %v129, %v142
    %v145 = vmul.f32 %v133, %v142
    %v146 = vmul.f32 %v137, %v142
    %v147 = vadd.f32 %v119, %v143
    %v148 = vadd.f32 %v120, %v144
    %v149 = vadd.f32 %v121, %v145
    %v150 = vadd.f32 %v122, %v146
    %151 = vset.pattern.permute.xlu0 3
    %152 = vperm.xlu0 %151, %v35
    %v153 = vpop.permute.xlu0 %152
    %155 = vset.pattern.permute.xlu0 3
    %156 = vperm.xlu0 %155, %v36
    %v157 = vpop.permute.xlu0 %156
    %159 = vset.pattern.permute.xlu0 3
    %160 = vperm.xlu0 %159, %v37
    %v161 = vpop.permute.xlu0 %160
    %163 = vset.pattern.permute.xlu0 3
    %164 = vperm.xlu0 %163, %v38
    %v165 = vpop.permute.xlu0 %164
    %v167 = vlaneseq
    %v168 = vshrl.u32 %v167, 7
    %v169 = vsub.s32 3, %v168
    %v170 = vrot.slane %v34, %v169
    %v171 = vmul.f32 %v153, %v170
    %v172 = vmul.f32 %v157, %v170
    %v173 = vmul.f32 %v161, %v170
    %v174 = vmul.f32 %v165, %v170
    %v175 = vadd.f32 %v147, %v171
    %v176 = vadd.f32 %v148, %v172
    %v177 = vadd.f32 %v149, %v173
    %v178 = vadd.f32 %v150, %v174
    %v179 = vmax.f32 %v175, 0.0
    %v180 = vmax.f32 %v176, 0.0
    %v181 = vmax.f32 %v177, 0.0
    %v182 = vmax.f32 %v178, 0.0
    %v183 = vld [vmem:[%s3] sm:$0xf]
    %v184 = vld [vmem:[%s3 + $0x4] sm:$0xf]
    %v185 = vld [vmem:[%s3 + $0x8] sm:$0xf]
    %v186 = vld [vmem:[%s3 + $0xc] sm:$0xf]
    %v187 = vpack.c.bf16 %v180, %v179
    %v188 = vpack.c.bf16 %v182, %v181
    %v189 = vld [vmem:[%s4] sm:$0xff]
    %v190 = vld [vmem:[%s4 + $0x8] sm:$0xff]
    %v191 = vld [vmem:[%s4 + $0x10] sm:$0xff]
    %v192 = vld [vmem:[%s4 + $0x18] sm:$0xff]
    %194 = vset.pattern.permute.xlu0 0
    %195 = vperm.xlu0 %194, %v189
    %v196 = vpop.permute.xlu0 %195
    %199 = vset.pattern.permute.xlu0 0
    %200 = vperm.xlu0 %199, %v190
    %v201 = vpop.permute.xlu0 %200
    %204 = vset.pattern.permute.xlu0 0
    %205 = vperm.xlu0 %204, %v191
    %v206 = vpop.permute.xlu0 %205
    %209 = vset.pattern.permute.xlu0 0
    %210 = vperm.xlu0 %209, %v192
    %v211 = vpop.permute.xlu0 %210
    %v217 = vunpack.c.l.b16 %v183
    %v218 = vunpack.c.l.b16 %v184
    %v219 = vunpack.c.l.b16 %v185
    %v220 = vunpack.c.l.b16 %v186
    %v221 = vpack.c.b16 %v218, %v217
    %v222 = vpack.c.b16 %v220, %v219
    %vm223 = vcmask 261120
    %v225 = vsel %vm223, %v221, 0
    %v228 = vsel %vm223, %v222, 0
    %230 = vmatprep.subr.bf16.mxu0 0
    %231 = vmatpush1.bf16.msra.mxu0 %v187
    %232 = vmatprep.subr.bf16.mxu0 0
    %233 = vmatpush1.bf16.msra.mxu0 %v188
    %234 = vmatprep.subr.bf16.mxu0 0
    %235 = vmatpush1.bf16.msra.mxu0 0
    %236 = vmatprep.subr.bf16.mxu0 0
    %237 = vmatpush1.bf16.msra.mxu0 0
    %238 = vmatprep.subr.bf16.mxu0 0
    %239 = vmatpush1.bf16.msra.mxu0 0
    %240 = vmatprep.subr.bf16.mxu0 0
    %241 = vmatpush1.bf16.msra.mxu0 0
    %242 = vmatprep.subr.bf16.mxu0 0
    %243 = vmatpush1.bf16.msra.mxu0 0
    %244 = vmatprep.subr.bf16.mxu0 0
    %245 = vmatpush1.bf16.msra.mxu0 0
    %246 = vmatprep.subr.bf16.mxu0 0
    %247 = vmatpush1.bf16.msra.mxu0 0
    %248 = vmatprep.subr.bf16.mxu0 0
    %249 = vmatpush1.bf16.msra.mxu0 0
    %250 = vmatprep.subr.bf16.mxu0 0
    %251 = vmatpush1.bf16.msra.mxu0 0
    %252 = vmatprep.subr.bf16.mxu0 0
    %253 = vmatpush1.bf16.msra.mxu0 0
    %254 = vmatprep.subr.bf16.mxu0 0
    %255 = vmatpush1.bf16.msra.mxu0 0
    %256 = vmatprep.subr.bf16.mxu0 0
    %257 = vmatpush1.bf16.msra.mxu0 0
    %258 = vmatprep.subr.bf16.mxu0 0
    %259 = vmatpush1.bf16.msra.mxu0 0
    %260 = vmatprep.subr.bf16.mxu0 0
    %261 = vmatpush1.bf16.msra.mxu0 0
    %262 = vmatprep.mubr.bf16.mxu0 0
    %263 = vmatmul.mubr.bf16.gmra.mrb[0].mxu0 %v225
    %v264 = vpop.f32.mrb[0].mxu0
    %v265 = vadd.f32 %v196, %v264
    %v266 = vpop.f32.mrb[0].mxu0
    %v267 = vpop.f32.mrb[0].mxu0
    %v268 = vadd.f32 %v201, %v267
    %v269 = vpop.f32.mrb[0].mxu0
    %270 = vmatprep.mubr.bf16.mxu0 0
    %271 = vmatmul.mubr.bf16.gmra.mrb[0].mxu0 %v228
    %v272 = vpop.f32.mrb[0].mxu0
    %v273 = vadd.f32 %v206, %v272
    %v274 = vpop.f32.mrb[0].mxu0
    %v275 = vpop.f32.mrb[0].mxu0
    %v276 = vadd.f32 %v211, %v275
    %v277 = vpop.f32.mrb[0].mxu0
    %278 = vdwg.mxu0
    %v279 = vmax.f32 %v265, 0.0
    %v280 = vmax.f32 %v268, 0.0
    %v281 = vmax.f32 %v273, 0.0
    %v282 = vmax.f32 %v276, 0.0
    %v283 = vld [vmem:[%s5] sm:$0xf]
    %v284 = vld [vmem:[%s5 + $0x4] sm:$0xf]
    %v285 = vld [vmem:[%s5 + $0x8] sm:$0xf]
    %v286 = vld [vmem:[%s5 + $0xc] sm:$0xf]
    %v287 = vpack.c.bf16 %v280, %v279
    %v288 = vpack.c.bf16 %v282, %v281
    %v289 = vld [vmem:[%s6] sm:$0xff]
    %v290 = vld [vmem:[%s6 + $0x8] sm:$0xff]
    %v291 = vld [vmem:[%s6 + $0x10] sm:$0xff]
    %v292 = vld [vmem:[%s6 + $0x18] sm:$0xff]
    %294 = vset.pattern.permute.xlu0 0
    %295 = vperm.xlu0 %294, %v289
    %v296 = vpop.permute.xlu0 %295
    %299 = vset.pattern.permute.xlu0 0
    %300 = vperm.xlu0 %299, %v290
    %v301 = vpop.permute.xlu0 %300
    %304 = vset.pattern.permute.xlu0 0
    %305 = vperm.xlu0 %304, %v291
    %v306 = vpop.permute.xlu0 %305
    %309 = vset.pattern.permute.xlu0 0
    %310 = vperm.xlu0 %309, %v292
    %v311 = vpop.permute.xlu0 %310
    %v317 = vunpack.c.l.b16 %v283
    %v318 = vunpack.c.l.b16 %v284
    %v319 = vunpack.c.l.b16 %v285
    %v320 = vunpack.c.l.b16 %v286
    %v321 = vpack.c.b16 %v318, %v317
    %v322 = vpack.c.b16 %v320, %v319
    %v324 = vsel %vm223, %v321, 0
    %v327 = vsel %vm223, %v322, 0
    %329 = vmatprep.subr.bf16.mxu0 0
    %330 = vmatpush1.bf16.msra.mxu0 %v287
    %331 = vmatprep.subr.bf16.mxu0 0
    %332 = vmatpush1.bf16.msra.mxu0 %v288
    %333 = vmatprep.subr.bf16.mxu0 0
    %334 = vmatpush1.bf16.msra.mxu0 0
    %335 = vmatprep.subr.bf16.mxu0 0
    %336 = vmatpush1.bf16.msra.mxu0 0
    %337 = vmatprep.subr.bf16.mxu0 0
    %338 = vmatpush1.bf16.msra.mxu0 0
    %339 = vmatprep.subr.bf16.mxu0 0
    %340 = vmatpush1.bf16.msra.mxu0 0
    %341 = vmatprep.subr.bf16.mxu0 0
    %342 = vmatpush1.bf16.msra.mxu0 0
    %343 = vmatprep.subr.bf16.mxu0 0
    %344 = vmatpush1.bf16.msra.mxu0 0
    %345 = vmatprep.subr.bf16.mxu0 0
    %346 = vmatpush1.bf16.msra.mxu0 0
    %347 = vmatprep.subr.bf16.mxu0 0
    %348 = vmatpush1.bf16.msra.mxu0 0
    %349 = vmatprep.subr.bf16.mxu0 0
    %350 = vmatpush1.bf16.msra.mxu0 0
    %351 = vmatprep.subr.bf16.mxu0 0
    %352 = vmatpush1.bf16.msra.mxu0 0
    %353 = vmatprep.subr.bf16.mxu0 0
    %354 = vmatpush1.bf16.msra.mxu0 0
    %355 = vmatprep.subr.bf16.mxu0 0
    %356 = vmatpush1.bf16.msra.mxu0 0
    %357 = vmatprep.subr.bf16.mxu0 0
    %358 = vmatpush1.bf16.msra.mxu0 0
    %359 = vmatprep.subr.bf16.mxu0 0
    %360 = vmatpush1.bf16.msra.mxu0 0
    %361 = vmatprep.mubr.bf16.mxu0 0
    %362 = vmatmul.mubr.bf16.gmra.mrb[0].mxu0 %v324
    %v363 = vpop.f32.mrb[0].mxu0
    %v364 = vadd.f32 %v296, %v363
    %v365 = vpop.f32.mrb[0].mxu0
    %v366 = vpop.f32.mrb[0].mxu0
    %v367 = vadd.f32 %v301, %v366
    %v368 = vpop.f32.mrb[0].mxu0
    %369 = vmatprep.mubr.bf16.mxu0 0
    %370 = vmatmul.mubr.bf16.gmra.mrb[0].mxu0 %v327
    %v371 = vpop.f32.mrb[0].mxu0
    %v372 = vadd.f32 %v306, %v371
    %v373 = vpop.f32.mrb[0].mxu0
    %v374 = vpop.f32.mrb[0].mxu0
    %v375 = vadd.f32 %v311, %v374
    %v376 = vpop.f32.mrb[0].mxu0
    %377 = vdwg.mxu0
    %v378 = vmax.f32 %v364, 0.0
    %v379 = vmax.f32 %v367, 0.0
    %v380 = vmax.f32 %v372, 0.0
    %v381 = vmax.f32 %v375, 0.0
    %v382 = vld [vmem:[%s7] sm:$0x3]
    %v383 = vpack.c.bf16 %v379, %v378
    %v384 = vpack.c.bf16 %v381, %v380
    %v385 = vld [vmem:[%s8] sm:$0xf]
    %387 = vset.pattern.permute.xlu0 0
    %388 = vperm.xlu0 %387, %v385
    %v389 = vpop.permute.xlu0 %388
    %v392 = vsel %vm223, %v382, 0
    %394 = vmatprep.subr.bf16.mxu0 0
    %395 = vmatpush1.bf16.msra.mxu0 %v383
    %396 = vmatprep.subr.bf16.mxu0 0
    %397 = vmatpush1.bf16.msra.mxu0 %v384
    %398 = vmatprep.subr.bf16.mxu0 0
    %399 = vmatpush1.bf16.msra.mxu0 0
    %400 = vmatprep.subr.bf16.mxu0 0
    %401 = vmatpush1.bf16.msra.mxu0 0
    %402 = vmatprep.subr.bf16.mxu0 0
    %403 = vmatpush1.bf16.msra.mxu0 0
    %404 = vmatprep.subr.bf16.mxu0 0
    %405 = vmatpush1.bf16.msra.mxu0 0
    %406 = vmatprep.subr.bf16.mxu0 0
    %407 = vmatpush1.bf16.msra.mxu0 0
    %408 = vmatprep.subr.bf16.mxu0 0
    %409 = vmatpush1.bf16.msra.mxu0 0
    %410 = vmatprep.subr.bf16.mxu0 0
    %411 = vmatpush1.bf16.msra.mxu0 0
    %412 = vmatprep.subr.bf16.mxu0 0
    %413 = vmatpush1.bf16.msra.mxu0 0
    %414 = vmatprep.subr.bf16.mxu0 0
    %415 = vmatpush1.bf16.msra.mxu0 0
    %416 = vmatprep.subr.bf16.mxu0 0
    %417 = vmatpush1.bf16.msra.mxu0 0
    %418 = vmatprep.subr.bf16.mxu0 0
    %419 = vmatpush1.bf16.msra.mxu0 0
    %420 = vmatprep.subr.bf16.mxu0 0
    %421 = vmatpush1.bf16.msra.mxu0 0
    %422 = vmatprep.subr.bf16.mxu0 0
    %423 = vmatpush1.bf16.msra.mxu0 0
    %424 = vmatprep.subr.bf16.mxu0 0
    %425 = vmatpush1.bf16.msra.mxu0 0
    %426 = vmatprep.mubr.bf16.mxu0 0
    %427 = vmatmul.mubr.bf16.gmra.mrb[0].mxu0 %v392
    %v428 = vpop.f32.mrb[0].mxu0
    %v429 = vadd.f32 %v389, %v428
    %v430 = vpop.f32.mrb[0].mxu0
    %v431 = vpop.f32.mrb[0].mxu0
    %v432 = vpop.f32.mrb[0].mxu0
    %433 = vdwg.mxu0
    %434 = vst [vmem:[#allocation2] sm:$0xf] %v429
    // Predicated region
    $region38: #{tpu_custom_call.1} parent=1 // pred_check
      _
    $region39: #{tpu_custom_call.1} parent=1 // pred_check_branch
      %436 = sbr.rel (0) target = $region41
    $region40: #{tpu_custom_call.1} parent=1 // pred_region
      %s438 = ssub.s32 64, 64
      %439 = vsyncadd [#allocation3], %s438
      %s441 = sshll.u32 [#allocation2], 4
      %s442 = int_to_ptr.vmem [resolvable:$true] %s441
      %444 = dma.vmem_to_hbm [thread:$0]  %s442, 64, %s9, [#allocation3]
    $region41: #{tpu_custom_call.1} parent=1 // pred_fallthru
      _
    // Predicated region
    $region42: #{tpu_custom_call.1} parent=1 // pred_check
      _
    $region43: #{tpu_custom_call.1} parent=1 // pred_check_branch
      %446 = sbr.rel (0) target = $region45
    $region44: #{tpu_custom_call.1} parent=1 // pred_region
      %447 = dma.done [#allocation3], 64
    $region45: #{tpu_custom_call.1} parent=1 // pred_fallthru
      _
    %448 = vsyncpa [#allocation3], 1

</llo_original>
